<compile_context>
chip_gen: v7x
topology: tpu7x:2x2x1
jax: 0.10.0
libtpu: 0.0.40
codegen_flags: <defaults>
</compile_context>

<pallas_src>
import math
import functools

import jax
import jax.numpy as jnp
from jax.experimental import pallas as pl
from jax.experimental.pallas import tpu as pltpu


# --------------------------------------------------------------------------- utils
def _round_up(v, m):
    return ((v + m - 1) // m) * m


# --------------------------------------------------------------------------- fused linear kernel
def _make_linear_kernel(has_bias, relu, has_affine):
    def kernel(*refs):
        x_ref, w_ref = refs[0], refs[1]
        idx = 2
        b_ref = s_ref = t_ref = None
        if has_bias:
            b_ref = refs[idx]; idx += 1
        if has_affine:
            s_ref, t_ref = refs[idx], refs[idx + 1]; idx += 2
        o_ref = refs[idx]
        # bf16 x bf16 -> f32 accumulation on the MXU; epilogue in f32 (VPU).
        acc = jnp.dot(x_ref[...], w_ref[...], preferred_element_type=jnp.float32)
        if has_bias:
            acc = acc + b_ref[...]
        if relu:
            acc = jnp.maximum(acc, 0.0)
        if has_affine:
            acc = acc * s_ref[...] + t_ref[...]
        o_ref[...] = acc
    return kernel


def pack_linear(w, b=None, bn_scale=None, bn_shift=None):
    """Pad (lane/sublane align) and bf16-cast weights ONCE at init time."""
    w = jnp.asarray(w, jnp.float32)
    K, N = w.shape
    Kp, Np = _round_up(K, 128), _round_up(N, 128)
    p = {"w": jnp.zeros((Kp, Np), jnp.float32).at[:K, :N].set(w).astype(jnp.bfloat16)}
    if b is not None:
        p["b"] = jnp.zeros((1, Np), jnp.float32).at[0, :N].set(jnp.asarray(b, jnp.float32))
    if bn_scale is not None:
        p["scale"] = jnp.zeros((1, Np), jnp.float32).at[0, :N].set(jnp.asarray(bn_scale, jnp.float32))
        p["shift"] = jnp.zeros((1, Np), jnp.float32).at[0, :N].set(jnp.asarray(bn_shift, jnp.float32))
    return p


def pallas_linear(p, x, out_dim, relu=False):
    """y = [affine](relu?(x @ W + b)) with pre-padded bf16 weights, row-tiled grid."""
    x = jnp.asarray(x, jnp.float32)
    M, K = x.shape
    Kp, Np = p["w"].shape
    has_bias = "b" in p
    has_affine = "scale" in p

    TM = min(128, _round_up(max(M, 1), 16))      # multiple of 16 (bf16 sublane packing)
    Mp = _round_up(max(M, 1), TM)
    xp = jnp.zeros((Mp, Kp), jnp.bfloat16).at[:M, :K].set(x.astype(jnp.bfloat16))

    inputs = [xp, p["w"]]
    in_specs = [pl.BlockSpec((TM, Kp), lambda i: (i, 0)),
                pl.BlockSpec((Kp, Np), lambda i: (0, 0))]
    if has_bias:
        inputs.append(p["b"])
        in_specs.append(pl.BlockSpec((1, Np), lambda i: (0, 0)))
    if has_affine:
        inputs += [p["scale"], p["shift"]]
        in_specs += [pl.BlockSpec((1, Np), lambda i: (0, 0)),
                     pl.BlockSpec((1, Np), lambda i: (0, 0))]

    flops = 2 * Mp * Kp * Np
    bytes_accessed = (Mp * Kp + Kp * Np) * 2 + Mp * Np * 4

    out = pl.pallas_call(
        _make_linear_kernel(has_bias, relu, has_affine),
        out_shape=jax.ShapeDtypeStruct((Mp, Np), jnp.float32),
        grid=(Mp // TM,),
        in_specs=in_specs,
        out_specs=pl.BlockSpec((TM, Np), lambda i: (i, 0)),
        compiler_params=pltpu.CompilerParams(dimension_semantics=("parallel",)),
        cost_estimate=pl.CostEstimate(flops=flops, transcendentals=0,
                                      bytes_accessed=bytes_accessed),
    )(*inputs)
    return out[:M, :out_dim]


# --------------------------------------------------------------------------- fused beta gate kernel
def _beta_gate_kernel(out_ref, xr_ref, wo_ref, wr_ref, wd_ref, o_ref):
    out = out_ref[...]
    xr = xr_ref[...]
    # lin_beta([out, x_r, out - x_r]) as three VPU dot-reductions (no 1-wide MXU call, no concat).
    z = jnp.sum(out * wo_ref[...] + xr * wr_ref[...] + (out - xr) * wd_ref[...],
                axis=-1, keepdims=True)
    beta = jax.nn.sigmoid(z)
    o_ref[...] = beta * xr + (1.0 - beta) * out


def pallas_beta_gate(p, out, x_r):
    M, HC = out.shape
    HCp = p["wo"].shape[1]
    TM = min(128, _round_up(max(M, 1), 16))
    Mp = _round_up(max(M, 1), TM)
    op = jnp.zeros((Mp, HCp), jnp.float32).at[:M, :HC].set(out)
    rp = jnp.zeros((Mp, HCp), jnp.float32).at[:M, :HC].set(x_r)
    res = pl.pallas_call(
        _beta_gate_kernel,
        out_shape=jax.ShapeDtypeStruct((Mp, HCp), jnp.float32),
        grid=(Mp // TM,),
        in_specs=[pl.BlockSpec((TM, HCp), lambda i: (i, 0)),
                  pl.BlockSpec((TM, HCp), lambda i: (i, 0)),
                  pl.BlockSpec((1, HCp), lambda i: (0, 0)),
                  pl.BlockSpec((1, HCp), lambda i: (0, 0)),
                  pl.BlockSpec((1, HCp), lambda i: (0, 0))],
        out_specs=pl.BlockSpec((TM, HCp), lambda i: (i, 0)),
        compiler_params=pltpu.CompilerParams(dimension_semantics=("parallel",)),
        cost_estimate=pl.CostEstimate(flops=8 * Mp * HCp, transcendentals=Mp,
                                      bytes_accessed=3 * Mp * HCp * 4),
    )(op, rp, p["wo"], p["wr"], p["wd"])
    return res[:M, :HC]


# --------------------------------------------------------------------------- parameter init
def _lin_w(key, in_d, out_d):
    return jax.random.normal(key, (in_d, out_d), jnp.float32) * (1.0 / math.sqrt(in_d))


def _lin_b(key, out_d):
    return jax.random.normal(key, (out_d,), jnp.float32) * 0.01


def _conv_params(keys, in_d, emb, heads, edge_dim):
    HC = heads * emb
    wq, bq = _lin_w(next(keys), in_d, HC), _lin_b(next(keys), HC)
    wk, bk = _lin_w(next(keys), in_d, HC), _lin_b(next(keys), HC)
    wv, bv = _lin_w(next(keys), in_d, HC), _lin_b(next(keys), HC)
    ws, bs = _lin_w(next(keys), in_d, HC), _lin_b(next(keys), HC)
    we = _lin_w(next(keys), edge_dim, HC)              # lin_edge: bias=False
    wbeta = _lin_w(next(keys), 3 * HC, 1)[:, 0]        # lin_beta: bias=False
    HCp = _round_up(HC, 128)

    def pad_vec(v):
        return jnp.zeros((1, HCp), jnp.float32).at[0, :HC].set(v)

    return {
        # fused [Wq | Wk | Wv | Wskip] -> single 4*HC-wide matmul
        "qkvs": pack_linear(jnp.concatenate([wq, wk, wv, ws], axis=1),
                            jnp.concatenate([bq, bk, bv, bs])),
        "edge": pack_linear(we),                       # no bias -> no bias DMA / add
        # lin_beta input ordering follows PyG TransformerConv: [out, x_r, out - x_r]
        "beta": {"wo": pad_vec(wbeta[:HC]),
                 "wr": pad_vec(wbeta[HC:2 * HC]),
                 "wd": pad_vec(wbeta[2 * HC:])},
    }


def _transf_bn_params(keys, in_d, out_d):
    w = _lin_w(next(keys), in_d, out_d)
    b = _lin_b(next(keys), out_d)
    # eval-mode BatchNorm1d at init: gamma=1, beta=0, running mean=0, var=1
    gamma = jnp.ones((out_d,), jnp.float32)
    beta = jnp.zeros((out_d,), jnp.float32)
    mean = jnp.zeros((out_d,), jnp.float32)
    var = jnp.ones((out_d,), jnp.float32)
    eps = 1e-5
    scale = gamma / jnp.sqrt(var + eps)
    shift = beta - mean * scale
    return pack_linear(w, b, bn_scale=scale, bn_shift=shift)


def _head_params(keys, in_d, out_d):
    return pack_linear(_lin_w(next(keys), in_d, out_d), _lin_b(next(keys), out_d))


def init_params(key, cfg):
    n_layers, topk_every = cfg["n_layers"], cfg["top_k_every_n"]
    n_pools = sum(1 for i in range(n_layers) if i % topk_every == 0)
    keys = iter(jax.random.split(key, 32 + 12 * n_layers))   # no key collisions
    params = {
        "conv1": _conv_params(keys, cfg["feature_size"], cfg["emb"], cfg["heads"], cfg["edge_dim"]),
        "transf1": _transf_bn_params(keys, cfg["heads"] * cfg["emb"], cfg["emb"]),
        "convs": [_conv_params(keys, cfg["emb"], cfg["emb"], cfg["heads"], cfg["edge_dim"])
                  for _ in range(n_layers)],
        "transfs": [_transf_bn_params(keys, cfg["heads"] * cfg["emb"], cfg["emb"])
                    for _ in range(n_layers)],
        "pools": [jax.random.normal(next(keys), (cfg["emb"],), jnp.float32) for _ in range(n_pools)],
        "linear1": _head_params(keys, 2 * cfg["emb"], cfg["dense"]),
        "linear2": _head_params(keys, cfg["dense"], cfg["dense"] // 2),
        "linear3": _head_params(keys, cfg["dense"] // 2, 1),
    }
    return params


# --------------------------------------------------------------------------- GNN building blocks
def transformer_conv(p, x, edge_src, edge_dst, edge_attr, edge_valid, heads, out_ch):
    """PyG TransformerConv (concat=True, root_weight=True, beta=True), eval mode.
    Dropped nodes/edges are masked (never physically removed) so shapes stay static."""
    N = x.shape[0]
    E = edge_src.shape[0]
    H, C = heads, out_ch
    HC = H * C

    # one fused MXU matmul for q | k | v | skip
    qkvs = pallas_linear(p["qkvs"], x, 4 * HC)
    q = qkvs[:, 0 * HC:1 * HC].reshape(N, H, C)
    k = qkvs[:, 1 * HC:2 * HC].reshape(N, H, C)
    v = qkvs[:, 2 * HC:3 * HC].reshape(N, H, C)
    x_r = qkvs[:, 3 * HC:4 * HC]

    if E > 0:
        e = pallas_linear(p["edge"], edge_attr, HC).reshape(E, H, C)
        # TODO(synk): fuse gather / segment-softmax / scatter into a PrefetchScalarGridSpec
        # Pallas kernel (pl.Element row gather); data-dependent indices stay in XLA for now.
        k_j = k[edge_src] + e
        q_i = q[edge_dst]
        alpha = jnp.sum(q_i * k_j, axis=-1) / math.sqrt(C)              # (E, H)
        alpha = jnp.where(edge_valid[:, None], alpha, -1e30)
        amax = jax.ops.segment_max(alpha, edge_dst, num_segments=N)     # (N, H)
        amax = jnp.maximum(amax, -1e30)                                 # guard empty segments
        ex = jnp.where(edge_valid[:, None], jnp.exp(alpha - amax[edge_dst]), 0.0)
        denom = jax.ops.segment_sum(ex, edge_dst, num_segments=N)
        attn = ex / jnp.maximum(denom[edge_dst], 1e-16)
        msg = (v[edge_src] + e) * attn[..., None]                       # (E, H, C)
        out = jax.ops.segment_sum(msg, edge_dst, num_segments=N).reshape(N, HC)
    else:
        out = jnp.zeros((N, HC), jnp.float32)

    # gated skip: beta = sigmoid(lin_beta([out, x_r, out - x_r])); out = beta*x_r + (1-beta)*out
    return pallas_beta_gate(p["beta"], out, x_r)


def topk_pool(pool_weight, x, batch, node_valid, edge_src, edge_dst, edge_valid,
              ratio, num_graphs):
    """PyG TopKPooling (nonlinearity=tanh, multiplier=1), fully on-device via masking."""
    N = x.shape[0]
    wnorm = jnp.sqrt(jnp.sum(pool_weight ** 2)) + 1e-16
    score = jnp.tanh((x @ pool_weight) / wnorm)                         # (N,)
    score_m = jnp.where(node_valid, score, -2.0)                        # invalid nodes rank last

    # sort key: graph id (primary, asc), score (secondary, desc); tanh in (-1,1) so gap of 8 is safe
    key = batch.astype(jnp.float32) * 8.0 + (1.0 - score_m)
    order = jnp.argsort(key)
    sorted_batch = batch[order]
    counts = jax.ops.segment_sum(jnp.ones((N,), jnp.int32), batch, num_segments=num_graphs)
    group_start = jnp.cumsum(counts) - counts
    ranks_sorted = jnp.arange(N, dtype=jnp.int32) - group_start[sorted_batch]
    rank = jnp.zeros((N,), jnp.int32).at[order].set(ranks_sorted)

    n_valid = jax.ops.segment_sum(node_valid.astype(jnp.int32), batch, num_segments=num_graphs)
    k_g = jnp.ceil(ratio * n_valid.astype(jnp.float32)).astype(jnp.int32)
    keep = node_valid & (rank < k_g[batch])

    x_new = jnp.where(keep[:, None], x * score[:, None], 0.0)
    edge_valid_new = edge_valid & keep[edge_src] & keep[edge_dst]
    return x_new, keep, edge_valid_new


def global_max_mean(x, batch, node_valid, num_graphs):
    xm = jnp.where(node_valid[:, None], x, -1e30)
    maxp = jax.ops.segment_max(xm, batch, num_segments=num_graphs)
    xs = jnp.where(node_valid[:, None], x, 0.0)
    sump = jax.ops.segment_sum(xs, batch, num_segments=num_graphs)
    cnt = jax.ops.segment_sum(node_valid.astype(jnp.float32), batch, num_segments=num_graphs)
    meanp = sump / jnp.maximum(cnt, 1.0)[:, None]
    return jnp.concatenate([maxp, meanp], axis=1)


# --------------------------------------------------------------------------- full forward
def gnn_forward(params, x, edge_attr, edge_src, edge_dst, batch, cfg, num_graphs):
    H, emb = cfg["heads"], cfg["emb"]
    n_layers, topk_every, ratio = cfg["n_layers"], cfg["top_k_every_n"], cfg["ratio"]
    N, E = x.shape[0], edge_src.shape[0]

    node_valid = jnp.ones((N,), dtype=bool)
    edge_valid = jnp.ones((E,), dtype=bool)

    x = transformer_conv(params["conv1"], x, edge_src, edge_dst, edge_attr, edge_valid, H, emb)
    x = pallas_linear(params["transf1"], x, emb, relu=True)      # Linear + ReLU + BN fused

    global_rep = []
    for i in range(n_layers):
        x = transformer_conv(params["convs"][i], x, edge_src, edge_dst, edge_attr,
                             edge_valid, H, emb)
        x = pallas_linear(params["transfs"][i], x, emb, relu=True)   # Linear + ReLU + BN fused
        # keep the exact reference condition (the `i == n_layers` clause is dead there too)
        if i % topk_every == 0 or i == n_layers:
            x, node_valid, edge_valid = topk_pool(
                params["pools"][i // topk_every], x, batch, node_valid,
                edge_src, edge_dst, edge_valid, ratio, num_graphs)
            global_rep.append(global_max_mean(x, batch, node_valid, num_graphs))

    g = sum(global_rep)
    g = pallas_linear(params["linear1"], g, cfg["dense"], relu=True)
    # F.dropout(p=0.8, training=False) -> identity
    g = pallas_linear(params["linear2"], g, cfg["dense"] // 2, relu=True)
    # F.dropout(p=0.8, training=False) -> identity
    g = pallas_linear(params["linear3"], g, 1, relu=False)
    return g


# --------------------------------------------------------------------------- main
if __name__ == "__main__":
    cfg = dict(feature_size=8, emb=32, heads=2, n_layers=2, edge_dim=4,
               dense=64, ratio=0.5, top_k_every_n=1)

    # Two small complete directed graphs of 6 nodes each.
    nodes_per_graph, num_graphs = 6, 2
    batch_list, src_list, dst_list = [], [], []
    for g in range(num_graphs):
        off = g * nodes_per_graph
        batch_list += [g] * nodes_per_graph
        for a in range(nodes_per_graph):
            for b in range(nodes_per_graph):
                if a != b:
                    src_list.append(off + a)
                    dst_list.append(off + b)
    batch_index = jnp.array(batch_list, jnp.int32)
    edge_src = jnp.array(src_list, jnp.int32)
    edge_dst = jnp.array(dst_list, jnp.int32)
    N = num_graphs * nodes_per_graph
    E = int(edge_src.shape[0])

    key = jax.random.PRNGKey(0)
    kx, ke, kp = jax.random.split(key, 3)
    x = jax.random.normal(kx, (N, cfg["feature_size"]), jnp.float32)
    edge_attr = jax.random.normal(ke, (E, cfg["edge_dim"]), jnp.float32)

    params = init_params(kp, cfg)

    fwd = jax.jit(functools.partial(gnn_forward, cfg=cfg, num_graphs=num_graphs))
    out = fwd(params, x, edge_attr, edge_src, edge_dst, batch_index)
    out = jax.block_until_ready(out)

    assert out.shape == (num_graphs, 1), out.shape
    assert bool(jnp.all(jnp.isfinite(out)))
    print("KERNEL_OK")
</pallas_src>

<mosaic_0001>
module attributes {stable_mosaic.version = 11 : i64} {
  func.func @kernel(%arg0: i32, %arg1: memref<16x128xbf16, #tpu.memory_space<vmem>>, %arg2: memref<128x256xbf16, #tpu.memory_space<vmem>>, %arg3: memref<1x256xf32, #tpu.memory_space<vmem>>, %arg4: memref<16x256xf32, #tpu.memory_space<vmem>>) attributes {dimension_semantics = [#tpu.dimension_semantics<parallel>], iteration_bounds = array<i64: 1>, scalar_prefetch = 0 : i64, scratch_operands = 0 : i64, tpu.core_type = #tpu.core_type<tc>, window_params = [{transform_indices = @transform_0, window_bounds = array<i64: 16, 128>}, {pipeline_mode = #tpu.pipeline_mode<synchronous>, transform_indices = @transform_1, window_bounds = array<i64: 128, 256>}, {pipeline_mode = #tpu.pipeline_mode<synchronous>, transform_indices = @transform_2, window_bounds = array<i64: 1, 256>}, {transform_indices = @transform_3, window_bounds = array<i64: 16, 256>}]} {
    %c0 = arith.constant 0 : index
    %c0_0 = arith.constant 0 : index
    %0 = vector.load %arg1[%c0, %c0_0] : memref<16x128xbf16, #tpu.memory_space<vmem>>, vector<16x128xbf16>
    %c0_1 = arith.constant 0 : index
    %c0_2 = arith.constant 0 : index
    %1 = vector.load %arg2[%c0_1, %c0_2] : memref<128x256xbf16, #tpu.memory_space<vmem>>, vector<128x256xbf16>
    %cst = arith.constant dense<0.000000e+00> : vector<16x256xf32>
    %2 = tpu.matmul %0, %1, %cst {dimension_numbers = #tpu.dot_dimension_numbers<[1], [0], [0], [1], [0, 0, 1, 1], [], []>} : vector<16x128xbf16>, vector<128x256xbf16>, vector<16x256xf32> -> vector<16x256xf32>
    %c0_3 = arith.constant 0 : index
    %c0_4 = arith.constant 0 : index
    %3 = vector.load %arg3[%c0_3, %c0_4] : memref<1x256xf32, #tpu.memory_space<vmem>>, vector<1x256xf32>
    %4 = vector.broadcast %3 : vector<1x256xf32> to vector<16x256xf32>
    %5 = arith.addf %2, %4 : vector<16x256xf32>
    %c0_5 = arith.constant 0 : index
    %c0_6 = arith.constant 0 : index
    %6 = vector.load %arg4[%c0_5, %c0_6] : memref<16x256xf32, #tpu.memory_space<vmem>>, vector<16x256xf32>
    tpu.vector_store %arg4[%c0_5, %c0_6], %5 {strides = array<i32>} : memref<16x256xf32, #tpu.memory_space<vmem>>, vector<16x256xf32>,
    return
  }
  func.func @transform_0(%arg0: i32) -> (i32, i32) {
    %c0_i32 = arith.constant 0 : i32
    %c0_i32_0 = arith.constant 0 : i32
    return %arg0, %c0_i32 : i32, i32
  }
  func.func @transform_1(%arg0: i32) -> (i32, i32) {
    %c0_i32 = arith.constant 0 : i32
    %c0_i32_0 = arith.constant 0 : i32
    %c0_i32_1 = arith.constant 0 : i32
    return %c0_i32, %c0_i32_0 : i32, i32
  }
  func.func @transform_2(%arg0: i32) -> (i32, i32) {
    %c0_i32 = arith.constant 0 : i32
    %c0_i32_0 = arith.constant 0 : i32
    %c0_i32_1 = arith.constant 0 : i32
    return %c0_i32, %c0_i32_0 : i32, i32
  }
  func.func @transform_3(%arg0: i32) -> (i32, i32) {
    %c0_i32 = arith.constant 0 : i32
    %c0_i32_0 = arith.constant 0 : i32
    return %arg0, %c0_i32 : i32, i32
  }
}

module attributes {stable_mosaic.version = 11 : i64} {
  func.func @kernel(%arg0: i32, %arg1: memref<64x128xbf16, #tpu.memory_space<vmem>>, %arg2: memref<128x128xbf16, #tpu.memory_space<vmem>>, %arg3: memref<64x128xf32, #tpu.memory_space<vmem>>) attributes {dimension_semantics = [#tpu.dimension_semantics<parallel>], iteration_bounds = array<i64: 1>, scalar_prefetch = 0 : i64, scratch_operands = 0 : i64, tpu.core_type = #tpu.core_type<tc>, window_params = [{transform_indices = @transform_0, window_bounds = array<i64: 64, 128>}, {pipeline_mode = #tpu.pipeline_mode<synchronous>, transform_indices = @transform_1, window_bounds = array<i64: 128, 128>}, {transform_indices = @transform_2, window_bounds = array<i64: 64, 128>}]} {
    %c0 = arith.constant 0 : index
    %c0_0 = arith.constant 0 : index
    %0 = vector.load %arg1[%c0, %c0_0] : memref<64x128xbf16, #tpu.memory_space<vmem>>, vector<64x128xbf16>
    %c0_1 = arith.constant 0 : index
    %c0_2 = arith.constant 0 : index
    %1 = vector.load %arg2[%c0_1, %c0_2] : memref<128x128xbf16, #tpu.memory_space<vmem>>, vector<128x128xbf16>
    %cst = arith.constant dense<0.000000e+00> : vector<64x128xf32>
    %2 = tpu.matmul %0, %1, %cst {dimension_numbers = #tpu.dot_dimension_numbers<[1], [0], [0], [1], [0, 0, 1, 1], [], []>} : vector<64x128xbf16>, vector<128x128xbf16>, vector<64x128xf32> -> vector<64x128xf32>
    %c0_3 = arith.constant 0 : index
    %c0_4 = arith.constant 0 : index
    %3 = vector.load %arg3[%c0_3, %c0_4] : memref<64x128xf32, #tpu.memory_space<vmem>>, vector<64x128xf32>
    tpu.vector_store %arg3[%c0_3, %c0_4], %2 {strides = array<i32>} : memref<64x128xf32, #tpu.memory_space<vmem>>, vector<64x128xf32>,
    return
  }
  func.func @transform_0(%arg0: i32) -> (i32, i32) {
    %c0_i32 = arith.constant 0 : i32
    %c0_i32_0 = arith.constant 0 : i32
    return %arg0, %c0_i32 : i32, i32
  }
  func.func @transform_1(%arg0: i32) -> (i32, i32) {
    %c0_i32 = arith.constant 0 : i32
    %c0_i32_0 = arith.constant 0 : i32
    %c0_i32_1 = arith.constant 0 : i32
    return %c0_i32, %c0_i32_0 : i32, i32
  }
  func.func @transform_2(%arg0: i32) -> (i32, i32) {
    %c0_i32 = arith.constant 0 : i32
    %c0_i32_0 = arith.constant 0 : i32
    return %arg0, %c0_i32 : i32, i32
  }
}

module attributes {stable_mosaic.version = 11 : i64} {
  func.func @_beta_gate_kernel(%arg0: i32, %arg1: memref<16x128xf32, #tpu.memory_space<vmem>>, %arg2: memref<16x128xf32, #tpu.memory_space<vmem>>, %arg3: memref<1x128xf32, #tpu.memory_space<vmem>>, %arg4: memref<1x128xf32, #tpu.memory_space<vmem>>, %arg5: memref<1x128xf32, #tpu.memory_space<vmem>>, %arg6: memref<16x128xf32, #tpu.memory_space<vmem>>) attributes {dimension_semantics = [#tpu.dimension_semantics<parallel>], iteration_bounds = array<i64: 1>, scalar_prefetch = 0 : i64, scratch_operands = 0 : i64, tpu.core_type = #tpu.core_type<tc>, window_params = [{transform_indices = @transform_0, window_bounds = array<i64: 16, 128>}, {transform_indices = @transform_1, window_bounds = array<i64: 16, 128>}, {pipeline_mode = #tpu.pipeline_mode<synchronous>, transform_indices = @transform_2, window_bounds = array<i64: 1, 128>}, {pipeline_mode = #tpu.pipeline_mode<synchronous>, transform_indices = @transform_3, window_bounds = array<i64: 1, 128>}, {pipeline_mode = #tpu.pipeline_mode<synchronous>, transform_indices = @transform_4, window_bounds = array<i64: 1, 128>}, {transform_indices = @transform_5, window_bounds = array<i64: 16, 128>}]} {
    %c0 = arith.constant 0 : index
    %c0_0 = arith.constant 0 : index
    %0 = vector.load %arg1[%c0, %c0_0] : memref<16x128xf32, #tpu.memory_space<vmem>>, vector<16x128xf32>
    %c0_1 = arith.constant 0 : index
    %c0_2 = arith.constant 0 : index
    %1 = vector.load %arg2[%c0_1, %c0_2] : memref<16x128xf32, #tpu.memory_space<vmem>>, vector<16x128xf32>
    %c0_3 = arith.constant 0 : index
    %c0_4 = arith.constant 0 : index
    %2 = vector.load %arg3[%c0_3, %c0_4] : memref<1x128xf32, #tpu.memory_space<vmem>>, vector<1x128xf32>
    %3 = vector.broadcast %2 : vector<1x128xf32> to vector<16x128xf32>
    %4 = arith.mulf %0, %3 : vector<16x128xf32>
    %c0_5 = arith.constant 0 : index
    %c0_6 = arith.constant 0 : index
    %5 = vector.load %arg4[%c0_5, %c0_6] : memref<1x128xf32, #tpu.memory_space<vmem>>, vector<1x128xf32>
    %6 = vector.broadcast %5 : vector<1x128xf32> to vector<16x128xf32>
    %7 = arith.mulf %1, %6 : vector<16x128xf32>
    %8 = arith.addf %4, %7 : vector<16x128xf32>
    %9 = arith.subf %0, %1 : vector<16x128xf32>
    %c0_7 = arith.constant 0 : index
    %c0_8 = arith.constant 0 : index
    %10 = vector.load %arg5[%c0_7, %c0_8] : memref<1x128xf32, #tpu.memory_space<vmem>>, vector<1x128xf32>
    %11 = vector.broadcast %10 : vector<1x128xf32> to vector<16x128xf32>
    %12 = arith.mulf %9, %11 : vector<16x128xf32>
    %13 = arith.addf %8, %12 : vector<16x128xf32>
    %cst = arith.constant dense<0.000000e+00> : vector<16xf32>
    %14 = vector.multi_reduction <add>, %13, %cst [1] : vector<16x128xf32> to vector<16xf32>
    %15 = vector.shape_cast %14 : vector<16xf32> to vector<16x1xf32>
    %16 = arith.negf %15 : vector<16x1xf32>
    %17 = math.exp %16 : vector<16x1xf32>
    %cst_9 = arith.constant 1.000000e+00 : f32
    %18 = vector.broadcast %cst_9 : f32 to vector<16x1xf32>
    %19 = arith.addf %18, %17 : vector<16x1xf32>
    %20 = arith.divf %18, %19 : vector<16x1xf32>
    %21 = vector.broadcast %20 : vector<16x1xf32> to vector<16x128xf32>
    %22 = arith.mulf %21, %1 : vector<16x128xf32>
    %cst_10 = arith.constant 1.000000e+00 : f32
    %23 = vector.broadcast %cst_10 : f32 to vector<16x1xf32>
    %24 = arith.subf %23, %20 : vector<16x1xf32>
    %25 = vector.broadcast %24 : vector<16x1xf32> to vector<16x128xf32>
    %26 = arith.mulf %25, %0 : vector<16x128xf32>
    %27 = arith.addf %22, %26 : vector<16x128xf32>
    %c0_11 = arith.constant 0 : index
    %c0_12 = arith.constant 0 : index
    %28 = vector.load %arg6[%c0_11, %c0_12] : memref<16x128xf32, #tpu.memory_space<vmem>>, vector<16x128xf32>
    tpu.vector_store %arg6[%c0_11, %c0_12], %27 {strides = array<i32>} : memref<16x128xf32, #tpu.memory_space<vmem>>, vector<16x128xf32>,
    return
  }
  func.func @transform_0(%arg0: i32) -> (i32, i32) {
    %c0_i32 = arith.constant 0 : i32
    %c0_i32_0 = arith.constant 0 : i32
    return %arg0, %c0_i32 : i32, i32
  }
  func.func @transform_1(%arg0: i32) -> (i32, i32) {
    %c0_i32 = arith.constant 0 : i32
    %c0_i32_0 = arith.constant 0 : i32
    return %arg0, %c0_i32 : i32, i32
  }
  func.func @transform_2(%arg0: i32) -> (i32, i32) {
    %c0_i32 = arith.constant 0 : i32
    %c0_i32_0 = arith.constant 0 : i32
    %c0_i32_1 = arith.constant 0 : i32
    return %c0_i32, %c0_i32_0 : i32, i32
  }
  func.func @transform_3(%arg0: i32) -> (i32, i32) {
    %c0_i32 = arith.constant 0 : i32
    %c0_i32_0 = arith.constant 0 : i32
    %c0_i32_1 = arith.constant 0 : i32
    return %c0_i32, %c0_i32_0 : i32, i32
  }
  func.func @transform_4(%arg0: i32) -> (i32, i32) {
    %c0_i32 = arith.constant 0 : i32
    %c0_i32_0 = arith.constant 0 : i32
    %c0_i32_1 = arith.constant 0 : i32
    return %c0_i32, %c0_i32_0 : i32, i32
  }
  func.func @transform_5(%arg0: i32) -> (i32, i32) {
    %c0_i32 = arith.constant 0 : i32
    %c0_i32_0 = arith.constant 0 : i32
    return %arg0, %c0_i32 : i32, i32
  }
}

module attributes {stable_mosaic.version = 11 : i64} {
  func.func @kernel(%arg0: i32, %arg1: memref<16x128xbf16, #tpu.memory_space<vmem>>, %arg2: memref<128x128xbf16, #tpu.memory_space<vmem>>, %arg3: memref<1x128xf32, #tpu.memory_space<vmem>>, %arg4: memref<1x128xf32, #tpu.memory_space<vmem>>, %arg5: memref<1x128xf32, #tpu.memory_space<vmem>>, %arg6: memref<16x128xf32, #tpu.memory_space<vmem>>) attributes {dimension_semantics = [#tpu.dimension_semantics<parallel>], iteration_bounds = array<i64: 1>, scalar_prefetch = 0 : i64, scratch_operands = 0 : i64, tpu.core_type = #tpu.core_type<tc>, window_params = [{transform_indices = @transform_0, window_bounds = array<i64: 16, 128>}, {pipeline_mode = #tpu.pipeline_mode<synchronous>, transform_indices = @transform_1, window_bounds = array<i64: 128, 128>}, {pipeline_mode = #tpu.pipeline_mode<synchronous>, transform_indices = @transform_2, window_bounds = array<i64: 1, 128>}, {pipeline_mode = #tpu.pipeline_mode<synchronous>, transform_indices = @transform_3, window_bounds = array<i64: 1, 128>}, {pipeline_mode = #tpu.pipeline_mode<synchronous>, transform_indices = @transform_4, window_bounds = array<i64: 1, 128>}, {transform_indices = @transform_5, window_bounds = array<i64: 16, 128>}]} {
    %c0 = arith.constant 0 : index
    %c0_0 = arith.constant 0 : index
    %0 = vector.load %arg1[%c0, %c0_0] : memref<16x128xbf16, #tpu.memory_space<vmem>>, vector<16x128xbf16>
    %c0_1 = arith.constant 0 : index
    %c0_2 = arith.constant 0 : index
    %1 = vector.load %arg2[%c0_1, %c0_2] : memref<128x128xbf16, #tpu.memory_space<vmem>>, vector<128x128xbf16>
    %cst = arith.constant dense<0.000000e+00> : vector<16x128xf32>
    %2 = tpu.matmul %0, %1, %cst {dimension_numbers = #tpu.dot_dimension_numbers<[1], [0], [0], [1], [0, 0, 1, 1], [], []>} : vector<16x128xbf16>, vector<128x128xbf16>, vector<16x128xf32> -> vector<16x128xf32>
    %c0_3 = arith.constant 0 : index
    %c0_4 = arith.constant 0 : index
    %3 = vector.load %arg3[%c0_3, %c0_4] : memref<1x128xf32, #tpu.memory_space<vmem>>, vector<1x128xf32>
    %4 = vector.broadcast %3 : vector<1x128xf32> to vector<16x128xf32>
    %5 = arith.addf %2, %4 : vector<16x128xf32>
    %cst_5 = arith.constant 0.000000e+00 : f32
    %6 = vector.broadcast %cst_5 : f32 to vector<16x128xf32>
    %7 = arith.maximumf %5, %6 : vector<16x128xf32>
    %c0_6 = arith.constant 0 : index
    %c0_7 = arith.constant 0 : index
    %8 = vector.load %arg4[%c0_6, %c0_7] : memref<1x128xf32, #tpu.memory_space<vmem>>, vector<1x128xf32>
    %9 = vector.broadcast %8 : vector<1x128xf32> to vector<16x128xf32>
    %10 = arith.mulf %7, %9 : vector<16x128xf32>
    %c0_8 = arith.constant 0 : index
    %c0_9 = arith.constant 0 : index
    %11 = vector.load %arg5[%c0_8, %c0_9] : memref<1x128xf32, #tpu.memory_space<vmem>>, vector<1x128xf32>
    %12 = vector.broadcast %11 : vector<1x128xf32> to vector<16x128xf32>
    %13 = arith.addf %10, %12 : vector<16x128xf32>
    %c0_10 = arith.constant 0 : index
    %c0_11 = arith.constant 0 : index
    %14 = vector.load %arg6[%c0_10, %c0_11] : memref<16x128xf32, #tpu.memory_space<vmem>>, vector<16x128xf32>
    tpu.vector_store %arg6[%c0_10, %c0_11], %13 {strides = array<i32>} : memref<16x128xf32, #tpu.memory_space<vmem>>, vector<16x128xf32>,
    return
  }
  func.func @transform_0(%arg0: i32) -> (i32, i32) {
    %c0_i32 = arith.constant 0 : i32
    %c0_i32_0 = arith.constant 0 : i32
    return %arg0, %c0_i32 : i32, i32
  }
  func.func @transform_1(%arg0: i32) -> (i32, i32) {
    %c0_i32 = arith.constant 0 : i32
    %c0_i32_0 = arith.constant 0 : i32
    %c0_i32_1 = arith.constant 0 : i32
    return %c0_i32, %c0_i32_0 : i32, i32
  }
  func.func @transform_2(%arg0: i32) -> (i32, i32) {
    %c0_i32 = arith.constant 0 : i32
    %c0_i32_0 = arith.constant 0 : i32
    %c0_i32_1 = arith.constant 0 : i32
    return %c0_i32, %c0_i32_0 : i32, i32
  }
  func.func @transform_3(%arg0: i32) -> (i32, i32) {
    %c0_i32 = arith.constant 0 : i32
    %c0_i32_0 = arith.constant 0 : i32
    %c0_i32_1 = arith.constant 0 : i32
    return %c0_i32, %c0_i32_0 : i32, i32
  }
  func.func @transform_4(%arg0: i32) -> (i32, i32) {
    %c0_i32 = arith.constant 0 : i32
    %c0_i32_0 = arith.constant 0 : i32
    %c0_i32_1 = arith.constant 0 : i32
    return %c0_i32, %c0_i32_0 : i32, i32
  }
  func.func @transform_5(%arg0: i32) -> (i32, i32) {
    %c0_i32 = arith.constant 0 : i32
    %c0_i32_0 = arith.constant 0 : i32
    return %arg0, %c0_i32 : i32, i32
  }
}

module attributes {stable_mosaic.version = 11 : i64} {
  func.func @kernel(%arg0: i32, %arg1: memref<16x128xbf16, #tpu.memory_space<vmem>>, %arg2: memref<128x128xbf16, #tpu.memory_space<vmem>>, %arg3: memref<1x128xf32, #tpu.memory_space<vmem>>, %arg4: memref<16x128xf32, #tpu.memory_space<vmem>>) attributes {dimension_semantics = [#tpu.dimension_semantics<parallel>], iteration_bounds = array<i64: 1>, scalar_prefetch = 0 : i64, scratch_operands = 0 : i64, tpu.core_type = #tpu.core_type<tc>, window_params = [{transform_indices = @transform_0, window_bounds = array<i64: 16, 128>}, {pipeline_mode = #tpu.pipeline_mode<synchronous>, transform_indices = @transform_1, window_bounds = array<i64: 128, 128>}, {pipeline_mode = #tpu.pipeline_mode<synchronous>, transform_indices = @transform_2, window_bounds = array<i64: 1, 128>}, {transform_indices = @transform_3, window_bounds = array<i64: 16, 128>}]} {
    %c0 = arith.constant 0 : index
    %c0_0 = arith.constant 0 : index
    %0 = vector.load %arg1[%c0, %c0_0] : memref<16x128xbf16, #tpu.memory_space<vmem>>, vector<16x128xbf16>
    %c0_1 = arith.constant 0 : index
    %c0_2 = arith.constant 0 : index
    %1 = vector.load %arg2[%c0_1, %c0_2] : memref<128x128xbf16, #tpu.memory_space<vmem>>, vector<128x128xbf16>
    %cst = arith.constant dense<0.000000e+00> : vector<16x128xf32>
    %2 = tpu.matmul %0, %1, %cst {dimension_numbers = #tpu.dot_dimension_numbers<[1], [0], [0], [1], [0, 0, 1, 1], [], []>} : vector<16x128xbf16>, vector<128x128xbf16>, vector<16x128xf32> -> vector<16x128xf32>
    %c0_3 = arith.constant 0 : index
    %c0_4 = arith.constant 0 : index
    %3 = vector.load %arg3[%c0_3, %c0_4] : memref<1x128xf32, #tpu.memory_space<vmem>>, vector<1x128xf32>
    %4 = vector.broadcast %3 : vector<1x128xf32> to vector<16x128xf32>
    %5 = arith.addf %2, %4 : vector<16x128xf32>
    %cst_5 = arith.constant 0.000000e+00 : f32
    %6 = vector.broadcast %cst_5 : f32 to vector<16x128xf32>
    %7 = arith.maximumf %5, %6 : vector<16x128xf32>
    %c0_6 = arith.constant 0 : index
    %c0_7 = arith.constant 0 : index
    %8 = vector.load %arg4[%c0_6, %c0_7] : memref<16x128xf32, #tpu.memory_space<vmem>>, vector<16x128xf32>
    tpu.vector_store %arg4[%c0_6, %c0_7], %7 {strides = array<i32>} : memref<16x128xf32, #tpu.memory_space<vmem>>, vector<16x128xf32>,
    return
  }
  func.func @transform_0(%arg0: i32) -> (i32, i32) {
    %c0_i32 = arith.constant 0 : i32
    %c0_i32_0 = arith.constant 0 : i32
    return %arg0, %c0_i32 : i32, i32
  }
  func.func @transform_1(%arg0: i32) -> (i32, i32) {
    %c0_i32 = arith.constant 0 : i32
    %c0_i32_0 = arith.constant 0 : i32
    %c0_i32_1 = arith.constant 0 : i32
    return %c0_i32, %c0_i32_0 : i32, i32
  }
  func.func @transform_2(%arg0: i32) -> (i32, i32) {
    %c0_i32 = arith.constant 0 : i32
    %c0_i32_0 = arith.constant 0 : i32
    %c0_i32_1 = arith.constant 0 : i32
    return %c0_i32, %c0_i32_0 : i32, i32
  }
  func.func @transform_3(%arg0: i32) -> (i32, i32) {
    %c0_i32 = arith.constant 0 : i32
    %c0_i32_0 = arith.constant 0 : i32
    return %arg0, %c0_i32 : i32, i32
  }
}

module attributes {stable_mosaic.version = 11 : i64} {
  func.func @kernel(%arg0: i32, %arg1: memref<16x128xbf16, #tpu.memory_space<vmem>>, %arg2: memref<128x128xbf16, #tpu.memory_space<vmem>>, %arg3: memref<1x128xf32, #tpu.memory_space<vmem>>, %arg4: memref<16x128xf32, #tpu.memory_space<vmem>>) attributes {dimension_semantics = [#tpu.dimension_semantics<parallel>], iteration_bounds = array<i64: 1>, scalar_prefetch = 0 : i64, scratch_operands = 0 : i64, tpu.core_type = #tpu.core_type<tc>, window_params = [{transform_indices = @transform_0, window_bounds = array<i64: 16, 128>}, {pipeline_mode = #tpu.pipeline_mode<synchronous>, transform_indices = @transform_1, window_bounds = array<i64: 128, 128>}, {pipeline_mode = #tpu.pipeline_mode<synchronous>, transform_indices = @transform_2, window_bounds = array<i64: 1, 128>}, {transform_indices = @transform_3, window_bounds = array<i64: 16, 128>}]} {
    %c0 = arith.constant 0 : index
    %c0_0 = arith.constant 0 : index
    %0 = vector.load %arg1[%c0, %c0_0] : memref<16x128xbf16, #tpu.memory_space<vmem>>, vector<16x128xbf16>
    %c0_1 = arith.constant 0 : index
    %c0_2 = arith.constant 0 : index
    %1 = vector.load %arg2[%c0_1, %c0_2] : memref<128x128xbf16, #tpu.memory_space<vmem>>, vector<128x128xbf16>
    %cst = arith.constant dense<0.000000e+00> : vector<16x128xf32>
    %2 = tpu.matmul %0, %1, %cst {dimension_numbers = #tpu.dot_dimension_numbers<[1], [0], [0], [1], [0, 0, 1, 1], [], []>} : vector<16x128xbf16>, vector<128x128xbf16>, vector<16x128xf32> -> vector<16x128xf32>
    %c0_3 = arith.constant 0 : index
    %c0_4 = arith.constant 0 : index
    %3 = vector.load %arg3[%c0_3, %c0_4] : memref<1x128xf32, #tpu.memory_space<vmem>>, vector<1x128xf32>
    %4 = vector.broadcast %3 : vector<1x128xf32> to vector<16x128xf32>
    %5 = arith.addf %2, %4 : vector<16x128xf32>
    %c0_5 = arith.constant 0 : index
    %c0_6 = arith.constant 0 : index
    %6 = vector.load %arg4[%c0_5, %c0_6] : memref<16x128xf32, #tpu.memory_space<vmem>>, vector<16x128xf32>
    tpu.vector_store %arg4[%c0_5, %c0_6], %5 {strides = array<i32>} : memref<16x128xf32, #tpu.memory_space<vmem>>, vector<16x128xf32>,
    return
  }
  func.func @transform_0(%arg0: i32) -> (i32, i32) {
    %c0_i32 = arith.constant 0 : i32
    %c0_i32_0 = arith.constant 0 : i32
    return %arg0, %c0_i32 : i32, i32
  }
  func.func @transform_1(%arg0: i32) -> (i32, i32) {
    %c0_i32 = arith.constant 0 : i32
    %c0_i32_0 = arith.constant 0 : i32
    %c0_i32_1 = arith.constant 0 : i32
    return %c0_i32, %c0_i32_0 : i32, i32
  }
  func.func @transform_2(%arg0: i32) -> (i32, i32) {
    %c0_i32 = arith.constant 0 : i32
    %c0_i32_0 = arith.constant 0 : i32
    %c0_i32_1 = arith.constant 0 : i32
    return %c0_i32, %c0_i32_0 : i32, i32
  }
  func.func @transform_3(%arg0: i32) -> (i32, i32) {
    %c0_i32 = arith.constant 0 : i32
    %c0_i32_0 = arith.constant 0 : i32
    return %arg0, %c0_i32 : i32, i32
  }
}

</mosaic_0001>

<llo_original>
// kernel: gnn_forward.16
$region0: #{gnn_forward.16}
  #allocation0 [shape = 'u32[]', space=smem, size = 0x4, offset = 0x4, fixed_abs, tag = 'smem constant byte address 0x4 - core index']
  #allocation1 [shape = 'u32[144,128]{1,0:T(1,128)}', space=vmem, size = 0x12000, scoped, tag = 'internal scratch']
  %s0 = inlined_call_operand.vmem [shape: bf16[64,128], index: 0, kind: input, shape index: {}]
  %s1 = inlined_call_operand.vmem [shape: bf16[128,128], index: 1, kind: input, shape index: {}]
  %s2 = inlined_call_operand.vmem [shape: f32[64,128], index: 2, kind: output, shape index: {}]
  %s3 = sld [smem:[#allocation0]]
  $region18: #{gnn_forward.16} parent=0
    _
  %s5 = ssub.s32 1, %s3
  %s6 = scalar_select 0, %s5, %s3
  // Predicated region
  $region2: #{gnn_forward.16} parent=0 // pred_check
    _
  $region3: #{gnn_forward.16} parent=0 // pred_check_branch
    %8 = sbr.rel (0) target = $region5
  $region4: #{gnn_forward.16} parent=0 // pred_region
    _
  $region5: #{gnn_forward.16} parent=0 // pred_fallthru
    _
  // Predicated region
  $region6: #{gnn_forward.16} parent=0 // pred_check
    _
  $region7: #{gnn_forward.16} parent=0 // pred_check_branch
    %10 = sbr.rel (0) target = $region9
  $region8: #{gnn_forward.16} parent=0 // pred_region
    _
  $region9: #{gnn_forward.16} parent=0 // pred_fallthru
    _
  %v12 = vld [vmem:[%s0] sm:$0xf]
  %v13 = vld [vmem:[%s0 + $0x4] sm:$0xf]
  %v14 = vld [vmem:[%s0 + $0x8] sm:$0xf]
  %v15 = vld [vmem:[%s0 + $0xc] sm:$0xf]
  %v16 = vld [vmem:[%s0 + $0x10] sm:$0xf]
  %v17 = vld [vmem:[%s0 + $0x14] sm:$0xf]
  %v18 = vld [vmem:[%s0 + $0x18] sm:$0xf]
  %v19 = vld [vmem:[%s0 + $0x1c] sm:$0xf]
  %v20 = vld [vmem:[%s1] sm:$0xf]
  %v21 = vld [vmem:[%s1 + $0x4] sm:$0xf]
  %v22 = vld [vmem:[%s1 + $0x8] sm:$0xf]
  %v23 = vld [vmem:[%s1 + $0xc] sm:$0xf]
  %v24 = vld [vmem:[%s1 + $0x10] sm:$0xf]
  %v25 = vld [vmem:[%s1 + $0x14] sm:$0xf]
  %v26 = vld [vmem:[%s1 + $0x18] sm:$0xf]
  %v27 = vld [vmem:[%s1 + $0x1c] sm:$0xf]
  %v28 = vld [vmem:[%s1 + $0x20] sm:$0xf]
  %v29 = vld [vmem:[%s1 + $0x24] sm:$0xf]
  %v30 = vld [vmem:[%s1 + $0x28] sm:$0xf]
  %v31 = vld [vmem:[%s1 + $0x2c] sm:$0xf]
  %v32 = vld [vmem:[%s1 + $0x30] sm:$0xf]
  %v33 = vld [vmem:[%s1 + $0x34] sm:$0xf]
  %v34 = vld [vmem:[%s1 + $0x38] sm:$0xf]
  %v35 = vld [vmem:[%s1 + $0x3c] sm:$0xf]
  %v44 = vunpack.c.l.b16 %v12
  %v45 = vunpack.c.l.b16 %v13
  %v46 = vunpack.c.l.b16 %v14
  %v47 = vunpack.c.l.b16 %v15
  %v48 = vunpack.c.l.b16 %v16
  %v49 = vunpack.c.l.b16 %v17
  %v50 = vunpack.c.l.b16 %v18
  %v51 = vunpack.c.l.b16 %v19
  %v52 = vpack.c.b16 %v45, %v44
  %v53 = vpack.c.b16 %v47, %v46
  %v54 = vpack.c.b16 %v49, %v48
  %v55 = vpack.c.b16 %v51, %v50
  %v76 = vunpack.c.l.b16 %v20
  %v77 = vunpack.c.l.b16 %v21
  %v78 = vunpack.c.l.b16 %v22
  %v79 = vunpack.c.l.b16 %v23
  %v80 = vunpack.c.l.b16 %v24
  %v81 = vunpack.c.l.b16 %v25
  %v82 = vunpack.c.l.b16 %v26
  %v83 = vunpack.c.l.b16 %v27
  %v84 = vunpack.c.l.b16 %v28
  %v85 = vunpack.c.l.b16 %v29
  %v86 = vunpack.c.l.b16 %v30
  %v87 = vunpack.c.l.b16 %v31
  %v88 = vunpack.c.l.b16 %v32
  %v89 = vunpack.c.l.b16 %v33
  %v90 = vunpack.c.l.b16 %v34
  %v91 = vunpack.c.l.b16 %v35
  %v92 = vpack.c.b16 %v77, %v76
  %v93 = vpack.c.b16 %v79, %v78
  %v94 = vpack.c.b16 %v81, %v80
  %v95 = vpack.c.b16 %v83, %v82
  %v96 = vpack.c.b16 %v85, %v84
  %v97 = vpack.c.b16 %v87, %v86
  %v98 = vpack.c.b16 %v89, %v88
  %v99 = vpack.c.b16 %v91, %v90
  %108 = vmatprep.subr.bf16.mxu0 0
  %109 = vmatpush1.bf16.msra.mxu0 %v92
  %110 = vmatprep.subr.bf16.mxu0 0
  %111 = vmatpush1.bf16.msra.mxu0 %v93
  %112 = vmatprep.subr.bf16.mxu0 0
  %113 = vmatpush1.bf16.msra.mxu0 %v94
  %114 = vmatprep.subr.bf16.mxu0 0
  %115 = vmatpush1.bf16.msra.mxu0 %v95
  %116 = vmatprep.subr.bf16.mxu0 0
  %117 = vmatpush1.bf16.msra.mxu0 %v96
  %118 = vmatprep.subr.bf16.mxu0 0
  %119 = vmatpush1.bf16.msra.mxu0 %v97
  %120 = vmatprep.subr.bf16.mxu0 0
  %121 = vmatpush1.bf16.msra.mxu0 %v98
  %122 = vmatprep.subr.bf16.mxu0 0
  %123 = vmatpush1.bf16.msra.mxu0 %v99
  %124 = vmatprep.subr.bf16.mxu0 0
  %125 = vmatpush1.bf16.msra.mxu0 0
  %126 = vmatprep.subr.bf16.mxu0 0
  %127 = vmatpush1.bf16.msra.mxu0 0
  %128 = vmatprep.subr.bf16.mxu0 0
  %129 = vmatpush1.bf16.msra.mxu0 0
  %130 = vmatprep.subr.bf16.mxu0 0
  %131 = vmatpush1.bf16.msra.mxu0 0
  %132 = vmatprep.subr.bf16.mxu0 0
  %133 = vmatpush1.bf16.msra.mxu0 0
  %134 = vmatprep.subr.bf16.mxu0 0
  %135 = vmatpush1.bf16.msra.mxu0 0
  %136 = vmatprep.subr.bf16.mxu0 0
  %137 = vmatpush1.bf16.msra.mxu0 0
  %138 = vmatprep.subr.bf16.mxu0 0
  %139 = vmatpush1.bf16.msra.mxu0 0
  %140 = vmatprep.mubr.bf16.mxu0 0
  %141 = vmatmul.mubr.bf16.gmra.mrb[0].mxu0 %v52
  %v142 = vpop.f32.mrb[0].mxu0
  %v143 = vadd.f32 0.0, %v142
  %v144 = vpop.f32.mrb[0].mxu0
  %v145 = vpop.f32.mrb[0].mxu0
  %v146 = vadd.f32 0.0, %v145
  %v147 = vpop.f32.mrb[0].mxu0
  %148 = vmatprep.mubr.bf16.mxu0 0
  %149 = vmatmul.mubr.bf16.gmra.mrb[0].mxu0 %v53
  %v150 = vpop.f32.mrb[0].mxu0
  %v151 = vadd.f32 0.0, %v150
  %v152 = vpop.f32.mrb[0].mxu0
  %v153 = vpop.f32.mrb[0].mxu0
  %v154 = vadd.f32 0.0, %v153
  %v155 = vpop.f32.mrb[0].mxu0
  %156 = vmatprep.mubr.bf16.mxu0 0
  %157 = vmatmul.mubr.bf16.gmra.mrb[0].mxu0 %v54
  %v158 = vpop.f32.mrb[0].mxu0
  %v159 = vadd.f32 0.0, %v158
  %v160 = vpop.f32.mrb[0].mxu0
  %v161 = vpop.f32.mrb[0].mxu0
  %v162 = vadd.f32 0.0, %v161
  %v163 = vpop.f32.mrb[0].mxu0
  %164 = vmatprep.mubr.bf16.mxu0 0
  %165 = vmatmul.mubr.bf16.gmra.mrb[0].mxu0 %v55
  %v166 = vpop.f32.mrb[0].mxu0
  %v167 = vadd.f32 0.0, %v166
  %v168 = vpop.f32.mrb[0].mxu0
  %v169 = vpop.f32.mrb[0].mxu0
  %v170 = vadd.f32 0.0, %v169
  %v171 = vpop.f32.mrb[0].mxu0
  %172 = vdwg.mxu0
  %173 = vst [vmem:[%s2] sm:$0xff] %v143
  %174 = vst [vmem:[%s2 + $0x8] sm:$0xff] %v146
  %175 = vst [vmem:[%s2 + $0x10] sm:$0xff] %v151
  %176 = vst [vmem:[%s2 + $0x18] sm:$0xff] %v154
  %177 = vst [vmem:[%s2 + $0x20] sm:$0xff] %v159
  %178 = vst [vmem:[%s2 + $0x28] sm:$0xff] %v162
  %179 = vst [vmem:[%s2 + $0x30] sm:$0xff] %v167
  %180 = vst [vmem:[%s2 + $0x38] sm:$0xff] %v170
  // Predicated region
  $region10: #{gnn_forward.16} parent=0 // pred_check
    _
  $region11: #{gnn_forward.16} parent=0 // pred_check_branch
    %182 = sbr.rel (0) target = $region13
  $region12: #{gnn_forward.16} parent=0 // pred_region
    _
  $region13: #{gnn_forward.16} parent=0 // pred_fallthru
    _
  // Predicated region
  $region14: #{gnn_forward.16} parent=0 // pred_check
    _
  $region15: #{gnn_forward.16} parent=0 // pred_check_branch
    %184 = sbr.rel (0) target = $region17
  $region16: #{gnn_forward.16} parent=0 // pred_region
    _
  $region17: #{gnn_forward.16} parent=0 // pred_fallthru
    _

// kernel: gnn_forward.15
$region0: #{gnn_forward.15}
  #allocation0 [shape = 'u32[]', space=smem, size = 0x4, offset = 0x4, fixed_abs, tag = 'smem constant byte address 0x4 - core index']
  #allocation1 [shape = 'u32[144,128]{1,0:T(1,128)}', space=vmem, size = 0x12000, scoped, tag = 'internal scratch']
  %s0 = inlined_call_operand.vmem [shape: bf16[16,128], index: 0, kind: input, shape index: {}]
  %s1 = inlined_call_operand.vmem [shape: bf16[128,256], index: 1, kind: input, shape index: {}]
  %s2 = inlined_call_operand.vmem [shape: f32[1,256], index: 2, kind: input, shape index: {}]
  %s3 = inlined_call_operand.vmem [shape: f32[16,256], index: 3, kind: output, shape index: {}]
  %s4 = sld [smem:[#allocation0]]
  $region22: #{gnn_forward.15} parent=0
    _
  %s6 = ssub.s32 1, %s4
  %s7 = scalar_select 0, %s6, %s4
  // Predicated region
  $region2: #{gnn_forward.15} parent=0 // pred_check
    _
  $region3: #{gnn_forward.15} parent=0 // pred_check_branch
    %9 = sbr.rel (0) target = $region5
  $region4: #{gnn_forward.15} parent=0 // pred_region
    _
  $region5: #{gnn_forward.15} parent=0 // pred_fallthru
    _
  // Predicated region
  $region6: #{gnn_forward.15} parent=0 // pred_check
    _
  $region7: #{gnn_forward.15} parent=0 // pred_check_branch
    %11 = sbr.rel (0) target = $region9
  $region8: #{gnn_forward.15} parent=0 // pred_region
    _
  $region9: #{gnn_forward.15} parent=0 // pred_fallthru
    _
  // Predicated region
  $region10: #{gnn_forward.15} parent=0 // pred_check
    _
  $region11: #{gnn_forward.15} parent=0 // pred_check_branch
    %13 = sbr.rel (0) target = $region13
  $region12: #{gnn_forward.15} parent=0 // pred_region
    _
  $region13: #{gnn_forward.15} parent=0 // pred_fallthru
    _
  %v15 = vld [vmem:[%s0] sm:$0xf]
  %v16 = vld [vmem:[%s0 + $0x4] sm:$0xf]
  %v17 = vld [vmem:[%s1] sm:$0xff]
  %v18 = vld [vmem:[%s1 + $0x8] sm:$0xff]
  %v19 = vld [vmem:[%s1 + $0x10] sm:$0xff]
  %v20 = vld [vmem:[%s1 + $0x18] sm:$0xff]
  %v21 = vld [vmem:[%s1 + $0x20] sm:$0xff]
  %v22 = vld [vmem:[%s1 + $0x28] sm:$0xff]
  %v23 = vld [vmem:[%s1 + $0x30] sm:$0xff]
  %v24 = vld [vmem:[%s1 + $0x38] sm:$0xff]
  %v25 = vld [vmem:[%s1 + $0x40] sm:$0xff]
  %v26 = vld [vmem:[%s1 + $0x48] sm:$0xff]
  %v27 = vld [vmem:[%s1 + $0x50] sm:$0xff]
  %v28 = vld [vmem:[%s1 + $0x58] sm:$0xff]
  %v29 = vld [vmem:[%s1 + $0x60] sm:$0xff]
  %v30 = vld [vmem:[%s1 + $0x68] sm:$0xff]
  %v31 = vld [vmem:[%s1 + $0x70] sm:$0xff]
  %v32 = vld [vmem:[%s1 + $0x78] sm:$0xff]
  %v33 = vld [vmem:[%s2] sm:$0x3]
  %v35 = vlaneseq
  %v36 = vshrl.u32 %v35, 7
  %v37 = vsub.s32 0, %v36
  %v38 = vrot.slane %v33, %v37
  %v39 = vlaneseq
  %v40 = vshrl.u32 %v39, 7
  %v41 = vsub.s32 1, %v40
  %v42 = vrot.slane %v33, %v41
  %v47 = vunpack.c.l.b16 %v15
  %v48 = vunpack.c.l.b16 %v16
  %v49 = vpack.c.b16 %v48, %v47
  %v67 = vunpack.c.l.b16 %v17
  %v68 = vunpack.c.h.b16 %v17
  %v69 = vunpack.c.l.b16 %v18
  %v70 = vunpack.c.h.b16 %v18
  %v71 = vunpack.c.l.b16 %v19
  %v72 = vunpack.c.h.b16 %v19
  %v73 = vunpack.c.l.b16 %v20
  %v74 = vunpack.c.h.b16 %v20
  %v75 = vunpack.c.l.b16 %v21
  %v76 = vunpack.c.h.b16 %v21
  %v77 = vunpack.c.l.b16 %v22
  %v78 = vunpack.c.h.b16 %v22
  %v79 = vunpack.c.l.b16 %v23
  %v80 = vunpack.c.h.b16 %v23
  %v81 = vunpack.c.l.b16 %v24
  %v82 = vunpack.c.h.b16 %v24
  %v83 = vunpack.c.l.b16 %v25
  %v84 = vunpack.c.h.b16 %v25
  %v85 = vunpack.c.l.b16 %v26
  %v86 = vunpack.c.h.b16 %v26
  %v87 = vunpack.c.l.b16 %v27
  %v88 = vunpack.c.h.b16 %v27
  %v89 = vunpack.c.l.b16 %v28
  %v90 = vunpack.c.h.b16 %v28
  %v91 = vunpack.c.l.b16 %v29
  %v92 = vunpack.c.h.b16 %v29
  %v93 = vunpack.c.l.b16 %v30
  %v94 = vunpack.c.h.b16 %v30
  %v95 = vunpack.c.l.b16 %v31
  %v96 = vunpack.c.h.b16 %v31
  %v97 = vunpack.c.l.b16 %v32
  %v98 = vunpack.c.h.b16 %v32
  %v99 = vpack.c.b16 %v69, %v67
  %v100 = vpack.c.b16 %v70, %v68
  %v101 = vpack.c.b16 %v73, %v71
  %v102 = vpack.c.b16 %v74, %v72
  %v103 = vpack.c.b16 %v77, %v75
  %v104 = vpack.c.b16 %v78, %v76
  %v105 = vpack.c.b16 %v81, %v79
  %v106 = vpack.c.b16 %v82, %v80
  %v107 = vpack.c.b16 %v85, %v83
  %v108 = vpack.c.b16 %v86, %v84
  %v109 = vpack.c.b16 %v89, %v87
  %v110 = vpack.c.b16 %v90, %v88
  %v111 = vpack.c.b16 %v93, %v91
  %v112 = vpack.c.b16 %v94, %v92
  %v113 = vpack.c.b16 %v97, %v95
  %v114 = vpack.c.b16 %v98, %v96
  %131 = vmatprep.subr.bf16.mxu0 %v100
  %132 = vmatpush1.bf16.msra.mxu0 %v99
  %133 = vmatprep.subr.bf16.mxu0 %v102
  %134 = vmatpush1.bf16.msra.mxu0 %v101
  %135 = vmatprep.subr.bf16.mxu0 %v104
  %136 = vmatpush1.bf16.msra.mxu0 %v103
  %137 = vmatprep.subr.bf16.mxu0 %v106
  %138 = vmatpush1.bf16.msra.mxu0 %v105
  %139 = vmatprep.subr.bf16.mxu0 %v108
  %140 = vmatpush1.bf16.msra.mxu0 %v107
  %141 = vmatprep.subr.bf16.mxu0 %v110
  %142 = vmatpush1.bf16.msra.mxu0 %v109
  %143 = vmatprep.subr.bf16.mxu0 %v112
  %144 = vmatpush1.bf16.msra.mxu0 %v111
  %145 = vmatprep.subr.bf16.mxu0 %v114
  %146 = vmatpush1.bf16.msra.mxu0 %v113
  %147 = vmatprep.subr.bf16.mxu0 0
  %148 = vmatpush1.bf16.msra.mxu0 0
  %149 = vmatprep.subr.bf16.mxu0 0
  %150 = vmatpush1.bf16.msra.mxu0 0
  %151 = vmatprep.subr.bf16.mxu0 0
  %152 = vmatpush1.bf16.msra.mxu0 0
  %153 = vmatprep.subr.bf16.mxu0 0
  %154 = vmatpush1.bf16.msra.mxu0 0
  %155 = vmatprep.subr.bf16.mxu0 0
  %156 = vmatpush1.bf16.msra.mxu0 0
  %157 = vmatprep.subr.bf16.mxu0 0
  %158 = vmatpush1.bf16.msra.mxu0 0
  %159 = vmatprep.subr.bf16.mxu0 0
  %160 = vmatpush1.bf16.msra.mxu0 0
  %161 = vmatprep.subr.bf16.mxu0 0
  %162 = vmatpush1.bf16.msra.mxu0 0
  %163 = vmatprep.mubr.bf16.mxu0 0
  %164 = vmatmul.mubr.bf16.gmra.mrb[0].mxu0 %v49
  %v165 = vpop.f32.mrb[0].mxu0
  %v166 = vadd.f32 %v38, %v165
  %v167 = vpop.f32.mrb[0].mxu0
  %v168 = vadd.f32 %v42, %v167
  %v169 = vpop.f32.mrb[0].mxu0
  %v170 = vadd.f32 %v38, %v169
  %v171 = vpop.f32.mrb[0].mxu0
  %v172 = vadd.f32 %v42, %v171
  %173 = vdwg.mxu0
  %174 = vst [vmem:[%s3] sm:$0xff] %v166
  %175 = vst [vmem:[%s3 + $0x8] sm:$0xff] %v168
  %176 = vst [vmem:[%s3 + $0x10] sm:$0xff] %v170
  %177 = vst [vmem:[%s3 + $0x18] sm:$0xff] %v172
  // Predicated region
  $region14: #{gnn_forward.15} parent=0 // pred_check
    _
  $region15: #{gnn_forward.15} parent=0 // pred_check_branch
    %179 = sbr.rel (0) target = $region17
  $region16: #{gnn_forward.15} parent=0 // pred_region
    _
  $region17: #{gnn_forward.15} parent=0 // pred_fallthru
    _
  // Predicated region
  $region18: #{gnn_forward.15} parent=0 // pred_check
    _
  $region19: #{gnn_forward.15} parent=0 // pred_check_branch
    %181 = sbr.rel (0) target = $region21
  $region20: #{gnn_forward.15} parent=0 // pred_region
    _
  $region21: #{gnn_forward.15} parent=0 // pred_fallthru
    _

// kernel: gnn_forward.17
$region0: #{gnn_forward.17}
  #allocation0 [shape = 'u32[]', space=smem, size = 0x4, offset = 0x4, fixed_abs, tag = 'smem constant byte address 0x4 - core index']
  #allocation1 [shape = 'u32[144,128]{1,0:T(1,128)}', space=vmem, size = 0x12000, scoped, tag = 'internal scratch']
  %s0 = inlined_call_operand.vmem [shape: f32[16,128], index: 0, kind: input, shape index: {}]
  %s1 = inlined_call_operand.vmem [shape: f32[16,128], index: 1, kind: input, shape index: {}]
  %s2 = inlined_call_operand.vmem [shape: f32[1,128], index: 2, kind: input, shape index: {}]
  %s3 = inlined_call_operand.vmem [shape: f32[1,128], index: 3, kind: input, shape index: {}]
  %s4 = inlined_call_operand.vmem [shape: f32[1,128], index: 4, kind: input, shape index: {}]
  %s5 = inlined_call_operand.vmem [shape: f32[16,128], index: 5, kind: output, shape index: {}]
  %s6 = sld [smem:[#allocation0]]
  $region30: #{gnn_forward.17} parent=0
    _
  %s8 = ssub.s32 1, %s6
  %s9 = scalar_select 0, %s8, %s6
  // Predicated region
  $region2: #{gnn_forward.17} parent=0 // pred_check
    _
  $region3: #{gnn_forward.17} parent=0 // pred_check_branch
    %11 = sbr.rel (0) target = $region5
  $region4: #{gnn_forward.17} parent=0 // pred_region
    _
  $region5: #{gnn_forward.17} parent=0 // pred_fallthru
    _
  // Predicated region
  $region6: #{gnn_forward.17} parent=0 // pred_check
    _
  $region7: #{gnn_forward.17} parent=0 // pred_check_branch
    %13 = sbr.rel (0) target = $region9
  $region8: #{gnn_forward.17} parent=0 // pred_region
    _
  $region9: #{gnn_forward.17} parent=0 // pred_fallthru
    _
  // Predicated region
  $region10: #{gnn_forward.17} parent=0 // pred_check
    _
  $region11: #{gnn_forward.17} parent=0 // pred_check_branch
    %15 = sbr.rel (0) target = $region13
  $region12: #{gnn_forward.17} parent=0 // pred_region
    _
  $region13: #{gnn_forward.17} parent=0 // pred_fallthru
    _
  // Predicated region
  $region14: #{gnn_forward.17} parent=0 // pred_check
    _
  $region15: #{gnn_forward.17} parent=0 // pred_check_branch
    %17 = sbr.rel (0) target = $region17
  $region16: #{gnn_forward.17} parent=0 // pred_region
    _
  $region17: #{gnn_forward.17} parent=0 // pred_fallthru
    _
  // Predicated region
  $region18: #{gnn_forward.17} parent=0 // pred_check
    _
  $region19: #{gnn_forward.17} parent=0 // pred_check_branch
    %19 = sbr.rel (0) target = $region21
  $region20: #{gnn_forward.17} parent=0 // pred_region
    _
  $region21: #{gnn_forward.17} parent=0 // pred_fallthru
    _
  %v20 = vld [vmem:[%s0] sm:$0xff]
  %v21 = vld [vmem:[%s0 + $0x8] sm:$0xff]
  %v22 = vld [vmem:[%s1] sm:$0xff]
  %v23 = vld [vmem:[%s1 + $0x8] sm:$0xff]
  %v24 = vld [vmem:[%s2] sm:$0x1]
  %v26 = vlaneseq
  %v27 = vshrl.u32 %v26, 7
  %v28 = vsub.s32 0, %v27
  %v29 = vrot.slane %v24, %v28
  %v31 = vmul.f32 %v20, %v29
  %v32 = vmul.f32 %v21, %v29
  %v33 = vld [vmem:[%s3] sm:$0x1]
  %v35 = vlaneseq
  %v36 = vshrl.u32 %v35, 7
  %v37 = vsub.s32 0, %v36
  %v38 = vrot.slane %v33, %v37
  %v40 = vmul.f32 %v22, %v38
  %v41 = vmul.f32 %v23, %v38
  %v42 = vadd.f32 %v31, %v40
  %v43 = vadd.f32 %v32, %v41
  %v44 = vsub.f32 %v20, %v22
  %v45 = vsub.f32 %v21, %v23
  %v46 = vld [vmem:[%s4] sm:$0x1]
  %v48 = vlaneseq
  %v49 = vshrl.u32 %v48, 7
  %v50 = vsub.s32 0, %v49
  %v51 = vrot.slane %v46, %v50
  %v53 = vmul.f32 %v44, %v51
  %v54 = vmul.f32 %v45, %v51
  %v55 = vadd.f32 %v42, %v53
  %v56 = vadd.f32 %v43, %v54
  %57 = vadd.xlane.f32.xlu0 %v55
  %v58 = vpop.xlane.xlu0 %57
  %59 = vadd.xlane.f32.xlu0 %v56
  %v60 = vpop.xlane.xlu0 %59
  %v61 = vxor.u32 %v58, 2147483648
  %v62 = vxor.u32 %v60, 2147483648
  %v63 = vmul.f32 %v61, 1.442695
  %v64 = vpow.pop %v63
  %v65 = vmul.f32 %v62, 1.442695
  %v66 = vpow.pop %v65
  %v67 = vadd.f32 %v64, 1.0
  %v68 = vadd.f32 %v66, 1.0
  %v69 = vrcp.pop %v67
  %v70 = vmul.f32 1.0, %v69
  %v71 = vrcp.pop %v68
  %v72 = vmul.f32 1.0, %v71
  %v73 = vmul.f32 %v70, %v22
  %v74 = vmul.f32 %v72, %v23
  %v75 = vsub.f32 1.0, %v70
  %v76 = vsub.f32 1.0, %v72
  %v77 = vmul.f32 %v75, %v20
  %v78 = vmul.f32 %v76, %v21
  %v79 = vadd.f32 %v73, %v77
  %v80 = vadd.f32 %v74, %v78
  %81 = vst [vmem:[%s5] sm:$0xff] %v79
  %82 = vst [vmem:[%s5 + $0x8] sm:$0xff] %v80
  // Predicated region
  $region22: #{gnn_forward.17} parent=0 // pred_check
    _
  $region23: #{gnn_forward.17} parent=0 // pred_check_branch
    %84 = sbr.rel (0) target = $region25
  $region24: #{gnn_forward.17} parent=0 // pred_region
    _
  $region25: #{gnn_forward.17} parent=0 // pred_fallthru
    _
  // Predicated region
  $region26: #{gnn_forward.17} parent=0 // pred_check
    _
  $region27: #{gnn_forward.17} parent=0 // pred_check_branch
    %86 = sbr.rel (0) target = $region29
  $region28: #{gnn_forward.17} parent=0 // pred_region
    _
  $region29: #{gnn_forward.17} parent=0 // pred_fallthru
    _

// kernel: gnn_forward.18
$region0: #{gnn_forward.18}
  #allocation0 [shape = 'u32[]', space=smem, size = 0x4, offset = 0x4, fixed_abs, tag = 'smem constant byte address 0x4 - core index']
  #allocation1 [shape = 'u32[144,128]{1,0:T(1,128)}', space=vmem, size = 0x12000, scoped, tag = 'internal scratch']
  %s0 = inlined_call_operand.vmem [shape: bf16[16,128], index: 0, kind: input, shape index: {}]
  %s1 = inlined_call_operand.vmem [shape: bf16[128,128], index: 1, kind: input, shape index: {}]
  %s2 = inlined_call_operand.vmem [shape: f32[1,128], index: 2, kind: input, shape index: {}]
  %s3 = inlined_call_operand.vmem [shape: f32[1,128], index: 3, kind: input, shape index: {}]
  %s4 = inlined_call_operand.vmem [shape: f32[1,128], index: 4, kind: input, shape index: {}]
  %s5 = inlined_call_operand.vmem [shape: f32[16,128], index: 5, kind: output, shape index: {}]
  %s6 = sld [smem:[#allocation0]]
  $region30: #{gnn_forward.18} parent=0
    _
  %s8 = ssub.s32 1, %s6
  %s9 = scalar_select 0, %s8, %s6
  // Predicated region
  $region2: #{gnn_forward.18} parent=0 // pred_check
    _
  $region3: #{gnn_forward.18} parent=0 // pred_check_branch
    %11 = sbr.rel (0) target = $region5
  $region4: #{gnn_forward.18} parent=0 // pred_region
    _
  $region5: #{gnn_forward.18} parent=0 // pred_fallthru
    _
  // Predicated region
  $region6: #{gnn_forward.18} parent=0 // pred_check
    _
  $region7: #{gnn_forward.18} parent=0 // pred_check_branch
    %13 = sbr.rel (0) target = $region9
  $region8: #{gnn_forward.18} parent=0 // pred_region
    _
  $region9: #{gnn_forward.18} parent=0 // pred_fallthru
    _
  // Predicated region
  $region10: #{gnn_forward.18} parent=0 // pred_check
    _
  $region11: #{gnn_forward.18} parent=0 // pred_check_branch
    %15 = sbr.rel (0) target = $region13
  $region12: #{gnn_forward.18} parent=0 // pred_region
    _
  $region13: #{gnn_forward.18} parent=0 // pred_fallthru
    _
  // Predicated region
  $region14: #{gnn_forward.18} parent=0 // pred_check
    _
  $region15: #{gnn_forward.18} parent=0 // pred_check_branch
    %17 = sbr.rel (0) target = $region17
  $region16: #{gnn_forward.18} parent=0 // pred_region
    _
  $region17: #{gnn_forward.18} parent=0 // pred_fallthru
    _
  // Predicated region
  $region18: #{gnn_forward.18} parent=0 // pred_check
    _
  $region19: #{gnn_forward.18} parent=0 // pred_check_branch
    %19 = sbr.rel (0) target = $region21
  $region20: #{gnn_forward.18} parent=0 // pred_region
    _
  $region21: #{gnn_forward.18} parent=0 // pred_fallthru
    _
  %v21 = vld [vmem:[%s0] sm:$0xf]
  %v22 = vld [vmem:[%s0 + $0x4] sm:$0xf]
  %v23 = vld [vmem:[%s1] sm:$0xf]
  %v24 = vld [vmem:[%s1 + $0x4] sm:$0xf]
  %v25 = vld [vmem:[%s1 + $0x8] sm:$0xf]
  %v26 = vld [vmem:[%s1 + $0xc] sm:$0xf]
  %v27 = vld [vmem:[%s1 + $0x10] sm:$0xf]
  %v28 = vld [vmem:[%s1 + $0x14] sm:$0xf]
  %v29 = vld [vmem:[%s1 + $0x18] sm:$0xf]
  %v30 = vld [vmem:[%s1 + $0x1c] sm:$0xf]
  %v31 = vld [vmem:[%s1 + $0x20] sm:$0xf]
  %v32 = vld [vmem:[%s1 + $0x24] sm:$0xf]
  %v33 = vld [vmem:[%s1 + $0x28] sm:$0xf]
  %v34 = vld [vmem:[%s1 + $0x2c] sm:$0xf]
  %v35 = vld [vmem:[%s1 + $0x30] sm:$0xf]
  %v36 = vld [vmem:[%s1 + $0x34] sm:$0xf]
  %v37 = vld [vmem:[%s1 + $0x38] sm:$0xf]
  %v38 = vld [vmem:[%s1 + $0x3c] sm:$0xf]
  %v39 = vld [vmem:[%s2] sm:$0x1]
  %v41 = vlaneseq
  %v42 = vshrl.u32 %v41, 7
  %v43 = vsub.s32 0, %v42
  %v44 = vrot.slane %v39, %v43
  %v48 = vunpack.c.l.b16 %v21
  %v49 = vunpack.c.l.b16 %v22
  %v50 = vpack.c.b16 %v49, %v48
  %v68 = vunpack.c.l.b16 %v23
  %v69 = vunpack.c.l.b16 %v24
  %v70 = vunpack.c.l.b16 %v25
  %v71 = vunpack.c.l.b16 %v26
  %v72 = vunpack.c.l.b16 %v27
  %v73 = vunpack.c.l.b16 %v28
  %v74 = vunpack.c.l.b16 %v29
  %v75 = vunpack.c.l.b16 %v30
  %v76 = vunpack.c.l.b16 %v31
  %v77 = vunpack.c.l.b16 %v32
  %v78 = vunpack.c.l.b16 %v33
  %v79 = vunpack.c.l.b16 %v34
  %v80 = vunpack.c.l.b16 %v35
  %v81 = vunpack.c.l.b16 %v36
  %v82 = vunpack.c.l.b16 %v37
  %v83 = vunpack.c.l.b16 %v38
  %v84 = vpack.c.b16 %v69, %v68
  %v85 = vpack.c.b16 %v71, %v70
  %v86 = vpack.c.b16 %v73, %v72
  %v87 = vpack.c.b16 %v75, %v74
  %v88 = vpack.c.b16 %v77, %v76
  %v89 = vpack.c.b16 %v79, %v78
  %v90 = vpack.c.b16 %v81, %v80
  %v91 = vpack.c.b16 %v83, %v82
  %100 = vmatprep.subr.bf16.mxu0 0
  %101 = vmatpush1.bf16.msra.mxu0 %v84
  %102 = vmatprep.subr.bf16.mxu0 0
  %103 = vmatpush1.bf16.msra.mxu0 %v85
  %104 = vmatprep.subr.bf16.mxu0 0
  %105 = vmatpush1.bf16.msra.mxu0 %v86
  %106 = vmatprep.subr.bf16.mxu0 0
  %107 = vmatpush1.bf16.msra.mxu0 %v87
  %108 = vmatprep.subr.bf16.mxu0 0
  %109 = vmatpush1.bf16.msra.mxu0 %v88
  %110 = vmatprep.subr.bf16.mxu0 0
  %111 = vmatpush1.bf16.msra.mxu0 %v89
  %112 = vmatprep.subr.bf16.mxu0 0
  %113 = vmatpush1.bf16.msra.mxu0 %v90
  %114 = vmatprep.subr.bf16.mxu0 0
  %115 = vmatpush1.bf16.msra.mxu0 %v91
  %116 = vmatprep.subr.bf16.mxu0 0
  %117 = vmatpush1.bf16.msra.mxu0 0
  %118 = vmatprep.subr.bf16.mxu0 0
  %119 = vmatpush1.bf16.msra.mxu0 0
  %120 = vmatprep.subr.bf16.mxu0 0
  %121 = vmatpush1.bf16.msra.mxu0 0
  %122 = vmatprep.subr.bf16.mxu0 0
  %123 = vmatpush1.bf16.msra.mxu0 0
  %124 = vmatprep.subr.bf16.mxu0 0
  %125 = vmatpush1.bf16.msra.mxu0 0
  %126 = vmatprep.subr.bf16.mxu0 0
  %127 = vmatpush1.bf16.msra.mxu0 0
  %128 = vmatprep.subr.bf16.mxu0 0
  %129 = vmatpush1.bf16.msra.mxu0 0
  %130 = vmatprep.subr.bf16.mxu0 0
  %131 = vmatpush1.bf16.msra.mxu0 0
  %132 = vmatprep.mubr.bf16.mxu0 0
  %133 = vmatmul.mubr.bf16.gmra.mrb[0].mxu0 %v50
  %v134 = vpop.f32.mrb[0].mxu0
  %v135 = vadd.f32 %v44, %v134
  %v136 = vpop.f32.mrb[0].mxu0
  %v137 = vpop.f32.mrb[0].mxu0
  %v138 = vadd.f32 %v44, %v137
  %v139 = vpop.f32.mrb[0].mxu0
  %140 = vdwg.mxu0
  %v141 = vmax.f32 %v135, 0.0
  %v142 = vmax.f32 %v138, 0.0
  %v143 = vld [vmem:[%s3] sm:$0x1]
  %v145 = vlaneseq
  %v146 = vshrl.u32 %v145, 7
  %v147 = vsub.s32 0, %v146
  %v148 = vrot.slane %v143, %v147
  %v150 = vmul.f32 %v141, %v148
  %v151 = vmul.f32 %v142, %v148
  %v152 = vld [vmem:[%s4] sm:$0x1]
  %v154 = vlaneseq
  %v155 = vshrl.u32 %v154, 7
  %v156 = vsub.s32 0, %v155
  %v157 = vrot.slane %v152, %v156
  %v159 = vadd.f32 %v150, %v157
  %v160 = vadd.f32 %v151, %v157
  %161 = vst [vmem:[%s5] sm:$0xff] %v159
  %162 = vst [vmem:[%s5 + $0x8] sm:$0xff] %v160
  // Predicated region
  $region22: #{gnn_forward.18} parent=0 // pred_check
    _
  $region23: #{gnn_forward.18} parent=0 // pred_check_branch
    %164 = sbr.rel (0) target = $region25
  $region24: #{gnn_forward.18} parent=0 // pred_region
    _
  $region25: #{gnn_forward.18} parent=0 // pred_fallthru
    _
  // Predicated region
  $region26: #{gnn_forward.18} parent=0 // pred_check
    _
  $region27: #{gnn_forward.18} parent=0 // pred_check_branch
    %166 = sbr.rel (0) target = $region29
  $region28: #{gnn_forward.18} parent=0 // pred_region
    _
  $region29: #{gnn_forward.18} parent=0 // pred_fallthru
    _

// kernel: gnn_forward.27
$region0: #{gnn_forward.27}
  #allocation0 [shape = 'u32[]', space=smem, size = 0x4, offset = 0x4, fixed_abs, tag = 'smem constant byte address 0x4 - core index']
  #allocation1 [shape = 'u32[144,128]{1,0:T(1,128)}', space=vmem, size = 0x12000, scoped, tag = 'internal scratch']
  %s0 = inlined_call_operand.vmem [shape: bf16[16,128], index: 0, kind: input, shape index: {}]
  %s1 = inlined_call_operand.vmem [shape: bf16[128,128], index: 1, kind: input, shape index: {}]
  %s2 = inlined_call_operand.vmem [shape: f32[1,128], index: 2, kind: input, shape index: {}]
  %s3 = inlined_call_operand.vmem [shape: f32[16,128], index: 3, kind: output, shape index: {}]
  %s4 = sld [smem:[#allocation0]]
  $region22: #{gnn_forward.27} parent=0
    _
  %s6 = ssub.s32 1, %s4
  %s7 = scalar_select 0, %s6, %s4
  // Predicated region
  $region2: #{gnn_forward.27} parent=0 // pred_check
    _
  $region3: #{gnn_forward.27} parent=0 // pred_check_branch
    %9 = sbr.rel (0) target = $region5
  $region4: #{gnn_forward.27} parent=0 // pred_region
    _
  $region5: #{gnn_forward.27} parent=0 // pred_fallthru
    _
  // Predicated region
  $region6: #{gnn_forward.27} parent=0 // pred_check
    _
  $region7: #{gnn_forward.27} parent=0 // pred_check_branch
    %11 = sbr.rel (0) target = $region9
  $region8: #{gnn_forward.27} parent=0 // pred_region
    _
  $region9: #{gnn_forward.27} parent=0 // pred_fallthru
    _
  // Predicated region
  $region10: #{gnn_forward.27} parent=0 // pred_check
    _
  $region11: #{gnn_forward.27} parent=0 // pred_check_branch
    %13 = sbr.rel (0) target = $region13
  $region12: #{gnn_forward.27} parent=0 // pred_region
    _
  $region13: #{gnn_forward.27} parent=0 // pred_fallthru
    _
  %v15 = vld [vmem:[%s0] sm:$0xf]
  %v16 = vld [vmem:[%s0 + $0x4] sm:$0xf]
  %v17 = vld [vmem:[%s1] sm:$0xf]
  %v18 = vld [vmem:[%s1 + $0x4] sm:$0xf]
  %v19 = vld [vmem:[%s1 + $0x8] sm:$0xf]
  %v20 = vld [vmem:[%s1 + $0xc] sm:$0xf]
  %v21 = vld [vmem:[%s1 + $0x10] sm:$0xf]
  %v22 = vld [vmem:[%s1 + $0x14] sm:$0xf]
  %v23 = vld [vmem:[%s1 + $0x18] sm:$0xf]
  %v24 = vld [vmem:[%s1 + $0x1c] sm:$0xf]
  %v25 = vld [vmem:[%s1 + $0x20] sm:$0xf]
  %v26 = vld [vmem:[%s1 + $0x24] sm:$0xf]
  %v27 = vld [vmem:[%s1 + $0x28] sm:$0xf]
  %v28 = vld [vmem:[%s1 + $0x2c] sm:$0xf]
  %v29 = vld [vmem:[%s1 + $0x30] sm:$0xf]
  %v30 = vld [vmem:[%s1 + $0x34] sm:$0xf]
  %v31 = vld [vmem:[%s1 + $0x38] sm:$0xf]
  %v32 = vld [vmem:[%s1 + $0x3c] sm:$0xf]
  %v33 = vld [vmem:[%s2] sm:$0x1]
  %v35 = vlaneseq
  %v36 = vshrl.u32 %v35, 7
  %v37 = vsub.s32 0, %v36
  %v38 = vrot.slane %v33, %v37
  %v42 = vunpack.c.l.b16 %v15
  %v43 = vunpack.c.l.b16 %v16
  %v44 = vpack.c.b16 %v43, %v42
  %v62 = vunpack.c.l.b16 %v17
  %v63 = vunpack.c.l.b16 %v18
  %v64 = vunpack.c.l.b16 %v19
  %v65 = vunpack.c.l.b16 %v20
  %v66 = vunpack.c.l.b16 %v21
  %v67 = vunpack.c.l.b16 %v22
  %v68 = vunpack.c.l.b16 %v23
  %v69 = vunpack.c.l.b16 %v24
  %v70 = vunpack.c.l.b16 %v25
  %v71 = vunpack.c.l.b16 %v26
  %v72 = vunpack.c.l.b16 %v27
  %v73 = vunpack.c.l.b16 %v28
  %v74 = vunpack.c.l.b16 %v29
  %v75 = vunpack.c.l.b16 %v30
  %v76 = vunpack.c.l.b16 %v31
  %v77 = vunpack.c.l.b16 %v32
  %v78 = vpack.c.b16 %v63, %v62
  %v79 = vpack.c.b16 %v65, %v64
  %v80 = vpack.c.b16 %v67, %v66
  %v81 = vpack.c.b16 %v69, %v68
  %v82 = vpack.c.b16 %v71, %v70
  %v83 = vpack.c.b16 %v73, %v72
  %v84 = vpack.c.b16 %v75, %v74
  %v85 = vpack.c.b16 %v77, %v76
  %94 = vmatprep.subr.bf16.mxu0 0
  %95 = vmatpush1.bf16.msra.mxu0 %v78
  %96 = vmatprep.subr.bf16.mxu0 0
  %97 = vmatpush1.bf16.msra.mxu0 %v79
  %98 = vmatprep.subr.bf16.mxu0 0
  %99 = vmatpush1.bf16.msra.mxu0 %v80
  %100 = vmatprep.subr.bf16.mxu0 0
  %101 = vmatpush1.bf16.msra.mxu0 %v81
  %102 = vmatprep.subr.bf16.mxu0 0
  %103 = vmatpush1.bf16.msra.mxu0 %v82
  %104 = vmatprep.subr.bf16.mxu0 0
  %105 = vmatpush1.bf16.msra.mxu0 %v83
  %106 = vmatprep.subr.bf16.mxu0 0
  %107 = vmatpush1.bf16.msra.mxu0 %v84
  %108 = vmatprep.subr.bf16.mxu0 0
  %109 = vmatpush1.bf16.msra.mxu0 %v85
  %110 = vmatprep.subr.bf16.mxu0 0
  %111 = vmatpush1.bf16.msra.mxu0 0
  %112 = vmatprep.subr.bf16.mxu0 0
  %113 = vmatpush1.bf16.msra.mxu0 0
  %114 = vmatprep.subr.bf16.mxu0 0
  %115 = vmatpush1.bf16.msra.mxu0 0
  %116 = vmatprep.subr.bf16.mxu0 0
  %117 = vmatpush1.bf16.msra.mxu0 0
  %118 = vmatprep.subr.bf16.mxu0 0
  %119 = vmatpush1.bf16.msra.mxu0 0
  %120 = vmatprep.subr.bf16.mxu0 0
  %121 = vmatpush1.bf16.msra.mxu0 0
  %122 = vmatprep.subr.bf16.mxu0 0
  %123 = vmatpush1.bf16.msra.mxu0 0
  %124 = vmatprep.subr.bf16.mxu0 0
  %125 = vmatpush1.bf16.msra.mxu0 0
  %126 = vmatprep.mubr.bf16.mxu0 0
  %127 = vmatmul.mubr.bf16.gmra.mrb[0].mxu0 %v44
  %v128 = vpop.f32.mrb[0].mxu0
  %v129 = vadd.f32 %v38, %v128
  %v130 = vpop.f32.mrb[0].mxu0
  %v131 = vpop.f32.mrb[0].mxu0
  %v132 = vadd.f32 %v38, %v131
  %v133 = vpop.f32.mrb[0].mxu0
  %134 = vdwg.mxu0
  %v135 = vmax.f32 %v129, 0.0
  %v136 = vmax.f32 %v132, 0.0
  %137 = vst [vmem:[%s3] sm:$0xff] %v135
  %138 = vst [vmem:[%s3 + $0x8] sm:$0xff] %v136
  // Predicated region
  $region14: #{gnn_forward.27} parent=0 // pred_check
    _
  $region15: #{gnn_forward.27} parent=0 // pred_check_branch
    %140 = sbr.rel (0) target = $region17
  $region16: #{gnn_forward.27} parent=0 // pred_region
    _
  $region17: #{gnn_forward.27} parent=0 // pred_fallthru
    _
  // Predicated region
  $region18: #{gnn_forward.27} parent=0 // pred_check
    _
  $region19: #{gnn_forward.27} parent=0 // pred_check_branch
    %142 = sbr.rel (0) target = $region21
  $region20: #{gnn_forward.27} parent=0 // pred_region
    _
  $region21: #{gnn_forward.27} parent=0 // pred_fallthru
    _

// kernel: gnn_forward.29
$region0: #{gnn_forward.29}
  #allocation0 [shape = 'u32[]', space=smem, size = 0x4, offset = 0x4, fixed_abs, tag = 'smem constant byte address 0x4 - core index']
  #allocation1 [shape = 'u32[144,128]{1,0:T(1,128)}', space=vmem, size = 0x12000, scoped, tag = 'internal scratch']
  %s0 = inlined_call_operand.vmem [shape: bf16[16,128], index: 0, kind: input, shape index: {}]
  %s1 = inlined_call_operand.vmem [shape: bf16[128,128], index: 1, kind: input, shape index: {}]
  %s2 = inlined_call_operand.vmem [shape: f32[1,128], index: 2, kind: input, shape index: {}]
  %s3 = inlined_call_operand.vmem [shape: f32[16,128], index: 3, kind: output, shape index: {}]
  %s4 = sld [smem:[#allocation0]]
  $region22: #{gnn_forward.29} parent=0
    _
  %s6 = ssub.s32 1, %s4
  %s7 = scalar_select 0, %s6, %s4
  // Predicated region
  $region2: #{gnn_forward.29} parent=0 // pred_check
    _
  $region3: #{gnn_forward.29} parent=0 // pred_check_branch
    %9 = sbr.rel (0) target = $region5
  $region4: #{gnn_forward.29} parent=0 // pred_region
    _
  $region5: #{gnn_forward.29} parent=0 // pred_fallthru
    _
  // Predicated region
  $region6: #{gnn_forward.29} parent=0 // pred_check
    _
  $region7: #{gnn_forward.29} parent=0 // pred_check_branch
    %11 = sbr.rel (0) target = $region9
  $region8: #{gnn_forward.29} parent=0 // pred_region
    _
  $region9: #{gnn_forward.29} parent=0 // pred_fallthru
    _
  // Predicated region
  $region10: #{gnn_forward.29} parent=0 // pred_check
    _
  $region11: #{gnn_forward.29} parent=0 // pred_check_branch
    %13 = sbr.rel (0) target = $region13
  $region12: #{gnn_forward.29} parent=0 // pred_region
    _
  $region13: #{gnn_forward.29} parent=0 // pred_fallthru
    _
  %v15 = vld [vmem:[%s0] sm:$0xf]
  %v16 = vld [vmem:[%s0 + $0x4] sm:$0xf]
  %v17 = vld [vmem:[%s1] sm:$0xf]
  %v18 = vld [vmem:[%s1 + $0x4] sm:$0xf]
  %v19 = vld [vmem:[%s1 + $0x8] sm:$0xf]
  %v20 = vld [vmem:[%s1 + $0xc] sm:$0xf]
  %v21 = vld [vmem:[%s1 + $0x10] sm:$0xf]
  %v22 = vld [vmem:[%s1 + $0x14] sm:$0xf]
  %v23 = vld [vmem:[%s1 + $0x18] sm:$0xf]
  %v24 = vld [vmem:[%s1 + $0x1c] sm:$0xf]
  %v25 = vld [vmem:[%s1 + $0x20] sm:$0xf]
  %v26 = vld [vmem:[%s1 + $0x24] sm:$0xf]
  %v27 = vld [vmem:[%s1 + $0x28] sm:$0xf]
  %v28 = vld [vmem:[%s1 + $0x2c] sm:$0xf]
  %v29 = vld [vmem:[%s1 + $0x30] sm:$0xf]
  %v30 = vld [vmem:[%s1 + $0x34] sm:$0xf]
  %v31 = vld [vmem:[%s1 + $0x38] sm:$0xf]
  %v32 = vld [vmem:[%s1 + $0x3c] sm:$0xf]
  %v33 = vld [vmem:[%s2] sm:$0x1]
  %v35 = vlaneseq
  %v36 = vshrl.u32 %v35, 7
  %v37 = vsub.s32 0, %v36
  %v38 = vrot.slane %v33, %v37
  %v42 = vunpack.c.l.b16 %v15
  %v43 = vunpack.c.l.b16 %v16
  %v44 = vpack.c.b16 %v43, %v42
  %v62 = vunpack.c.l.b16 %v17
  %v63 = vunpack.c.l.b16 %v18
  %v64 = vunpack.c.l.b16 %v19
  %v65 = vunpack.c.l.b16 %v20
  %v66 = vunpack.c.l.b16 %v21
  %v67 = vunpack.c.l.b16 %v22
  %v68 = vunpack.c.l.b16 %v23
  %v69 = vunpack.c.l.b16 %v24
  %v70 = vunpack.c.l.b16 %v25
  %v71 = vunpack.c.l.b16 %v26
  %v72 = vunpack.c.l.b16 %v27
  %v73 = vunpack.c.l.b16 %v28
  %v74 = vunpack.c.l.b16 %v29
  %v75 = vunpack.c.l.b16 %v30
  %v76 = vunpack.c.l.b16 %v31
  %v77 = vunpack.c.l.b16 %v32
  %v78 = vpack.c.b16 %v63, %v62
  %v79 = vpack.c.b16 %v65, %v64
  %v80 = vpack.c.b16 %v67, %v66
  %v81 = vpack.c.b16 %v69, %v68
  %v82 = vpack.c.b16 %v71, %v70
  %v83 = vpack.c.b16 %v73, %v72
  %v84 = vpack.c.b16 %v75, %v74
  %v85 = vpack.c.b16 %v77, %v76
  %94 = vmatprep.subr.bf16.mxu0 0
  %95 = vmatpush1.bf16.msra.mxu0 %v78
  %96 = vmatprep.subr.bf16.mxu0 0
  %97 = vmatpush1.bf16.msra.mxu0 %v79
  %98 = vmatprep.subr.bf16.mxu0 0
  %99 = vmatpush1.bf16.msra.mxu0 %v80
  %100 = vmatprep.subr.bf16.mxu0 0
  %101 = vmatpush1.bf16.msra.mxu0 %v81
  %102 = vmatprep.subr.bf16.mxu0 0
  %103 = vmatpush1.bf16.msra.mxu0 %v82
  %104 = vmatprep.subr.bf16.mxu0 0
  %105 = vmatpush1.bf16.msra.mxu0 %v83
  %106 = vmatprep.subr.bf16.mxu0 0
  %107 = vmatpush1.bf16.msra.mxu0 %v84
  %108 = vmatprep.subr.bf16.mxu0 0
  %109 = vmatpush1.bf16.msra.mxu0 %v85
  %110 = vmatprep.subr.bf16.mxu0 0
  %111 = vmatpush1.bf16.msra.mxu0 0
  %112 = vmatprep.subr.bf16.mxu0 0
  %113 = vmatpush1.bf16.msra.mxu0 0
  %114 = vmatprep.subr.bf16.mxu0 0
  %115 = vmatpush1.bf16.msra.mxu0 0
  %116 = vmatprep.subr.bf16.mxu0 0
  %117 = vmatpush1.bf16.msra.mxu0 0
  %118 = vmatprep.subr.bf16.mxu0 0
  %119 = vmatpush1.bf16.msra.mxu0 0
  %120 = vmatprep.subr.bf16.mxu0 0
  %121 = vmatpush1.bf16.msra.mxu0 0
  %122 = vmatprep.subr.bf16.mxu0 0
  %123 = vmatpush1.bf16.msra.mxu0 0
  %124 = vmatprep.subr.bf16.mxu0 0
  %125 = vmatpush1.bf16.msra.mxu0 0
  %126 = vmatprep.mubr.bf16.mxu0 0
  %127 = vmatmul.mubr.bf16.gmra.mrb[0].mxu0 %v44
  %v128 = vpop.f32.mrb[0].mxu0
  %v129 = vadd.f32 %v38, %v128
  %v130 = vpop.f32.mrb[0].mxu0
  %v131 = vpop.f32.mrb[0].mxu0
  %v132 = vadd.f32 %v38, %v131
  %v133 = vpop.f32.mrb[0].mxu0
  %134 = vdwg.mxu0
  %135 = vst [vmem:[%s3] sm:$0xff] %v129
  %136 = vst [vmem:[%s3 + $0x8] sm:$0xff] %v132
  // Predicated region
  $region14: #{gnn_forward.29} parent=0 // pred_check
    _
  $region15: #{gnn_forward.29} parent=0 // pred_check_branch
    %138 = sbr.rel (0) target = $region17
  $region16: #{gnn_forward.29} parent=0 // pred_region
    _
  $region17: #{gnn_forward.29} parent=0 // pred_fallthru
    _
  // Predicated region
  $region18: #{gnn_forward.29} parent=0 // pred_check
    _
  $region19: #{gnn_forward.29} parent=0 // pred_check_branch
    %140 = sbr.rel (0) target = $region21
  $region20: #{gnn_forward.29} parent=0 // pred_region
    _
  $region21: #{gnn_forward.29} parent=0 // pred_fallthru
    _

</llo_original>
